<compile_context>
chip_gen: v5e
topology: v5e:2x2
jax: 0.10.0
libtpu: 0.0.40
codegen_flags: <defaults>
</compile_context>

<pallas_src>
import jax
import jax.numpy as jnp
from jax.experimental import pallas as pl
from jax.experimental.pallas import tpu as pltpu

_LANES = 128
_MAX_TILE_ROWS = 8192    # 4 MiB per f32 block -> 16 MiB double-buffered in+out
_SMALL_ROWS = 2048       # <= 1 MiB f32: run as a single block


def _erf_kernel(x_ref, o_ref):
    # Upcast in-kernel; input travels HBM->VMEM in its native dtype.
    x = x_ref[...].astype(jnp.float32)
    # erf saturates to +/-1 well before |x|=8; the clamp keeps exp(-ax*ax)
    # finite for +/-inf inputs.  NaN propagates through jnp.minimum.
    ax = jnp.minimum(jnp.abs(x), 8.0)

    # Abramowitz & Stegun 7.1.26 (max abs error ~1.5e-7).  Exact f32 divide:
    # the approximate-reciprocal trick was not accurate enough at 5e-6 abs tol.
    t = 1.0 / (1.0 + 0.3275911 * ax)
    poly = t * (0.254829592
                + t * (-0.284496736
                       + t * (1.421413741
                              + t * (-1.453152027
                                     + t * 1.061405429))))
    y = 1.0 - poly * jnp.exp(-ax * ax)

    # erf is odd: restore the sign of x.
    y = jnp.where(x < 0.0, -y, y)

    o_ref[...] = y.astype(o_ref.dtype)


def erf_pallas(x):
    """Elementwise erf(x) via a Pallas TPU kernel. Matches torch.erf semantics."""
    orig_shape = x.shape
    if not jnp.issubdtype(x.dtype, jnp.floating):
        # torch.erf promotes integer inputs to the default float dtype.
        x = x.astype(jnp.float32)
    out_dtype = x.dtype
    n = x.size
    if n == 0:
        return jnp.zeros(orig_shape, out_dtype)

    flat = x.reshape(-1)
    rows = pl.cdiv(n, _LANES)
    ragged = (n % _LANES) != 0
    if ragged:
        # TODO(synk): only the <128-element tail needs padding; jnp.pad costs
        # one extra HBM read+write.  Typical NN activation counts are multiples
        # of 128 and take the copy-free path (contiguous reshape = bitcast).
        flat = jnp.pad(flat, (0, rows * _LANES - n))
    x2d = flat.reshape(rows, _LANES)

    if rows <= _SMALL_ROWS:
        # Small input: one block covering the whole array (block_shape equal to
        # the full array dims, so no sublane-multiple requirement).
        tile_rows = rows
        grid = 1
    else:
        # Even number of blocks (balanced across v7x's two TensorCores), at
        # least 4 so each core keeps a double-buffered pipeline, each block
        # capped at _MAX_TILE_ROWS.  The ragged last row-block is handled by
        # Pallas; no padding up to grid*tile_rows.
        n_blocks = max(4, pl.cdiv(rows, _MAX_TILE_ROWS))
        n_blocks += n_blocks % 2
        tile_rows = pl.cdiv(pl.cdiv(rows, n_blocks), 8) * 8
        grid = pl.cdiv(rows, tile_rows)

    itemsize = jnp.dtype(out_dtype).itemsize
    cost = pl.CostEstimate(
        flops=25 * n,
        transcendentals=2 * n,            # exp + the divide's reciprocal
        bytes_accessed=2 * itemsize * n,  # one read + one write, native dtype
    )

    out = pl.pallas_call(
        _erf_kernel,
        out_shape=jax.ShapeDtypeStruct((rows, _LANES), out_dtype),
        grid=(grid,),
        in_specs=[pl.BlockSpec((tile_rows, _LANES), lambda i: (i, 0))],
        out_specs=pl.BlockSpec((tile_rows, _LANES), lambda i: (i, 0)),
        compiler_params=pltpu.CompilerParams(
            dimension_semantics=("parallel",),
            vmem_limit_bytes=32 * 1024 * 1024,
        ),
        cost_estimate=cost,
    )(x2d)

    out = out.reshape(-1)
    if ragged:
        out = out[:n]
    return out.reshape(orig_shape)


if __name__ == "__main__":
    key = jax.random.PRNGKey(0)
    # NCHW input, same convention as the PyTorch module would receive.
    x = jax.random.normal(key, (2, 4, 16, 16), dtype=jnp.float32) * 2.0

    y = erf_pallas(x)
    jax.block_until_ready(y)

    # Sanity check against the reference erf.
    y_ref = jax.scipy.special.erf(x)
    assert y.shape == x.shape and y.dtype == x.dtype
    max_err = float(jnp.max(jnp.abs(y - y_ref)))
    assert max_err < 1e-5, f"max abs error {max_err} too large"

    print("KERNEL_OK")
</pallas_src>

<mosaic_0001>
module attributes {stable_mosaic.version = 11 : i64} {
  func.func @_erf_kernel(%arg0: i32, %arg1: memref<16x128xf32, #tpu.memory_space<vmem>>, %arg2: memref<16x128xf32, #tpu.memory_space<vmem>>) attributes {dimension_semantics = [#tpu.dimension_semantics<parallel>], iteration_bounds = array<i64: 1>, scalar_prefetch = 0 : i64, scratch_operands = 0 : i64, tpu.core_type = #tpu.core_type<tc>, window_params = [{transform_indices = @transform_0, window_bounds = array<i64: 16, 128>}, {transform_indices = @transform_1, window_bounds = array<i64: 16, 128>}]} {
    %c0 = arith.constant 0 : index
    %c0_0 = arith.constant 0 : index
    %0 = vector.load %arg1[%c0, %c0_0] : memref<16x128xf32, #tpu.memory_space<vmem>>, vector<16x128xf32>
    %1 = math.absf %0 : vector<16x128xf32>
    %cst = arith.constant 8.000000e+00 : f32
    %2 = vector.broadcast %cst : f32 to vector<16x128xf32>
    %3 = arith.minimumf %1, %2 : vector<16x128xf32>
    %cst_1 = arith.constant 0.327591091 : f32
    %4 = vector.broadcast %cst_1 : f32 to vector<16x128xf32>
    %5 = arith.mulf %4, %3 : vector<16x128xf32>
    %cst_2 = arith.constant 1.000000e+00 : f32
    %6 = vector.broadcast %cst_2 : f32 to vector<16x128xf32>
    %7 = arith.addf %6, %5 : vector<16x128xf32>
    %cst_3 = arith.constant 1.000000e+00 : f32
    %8 = vector.broadcast %cst_3 : f32 to vector<16x128xf32>
    %9 = arith.divf %8, %7 : vector<16x128xf32>
    %cst_4 = arith.constant 1.06140542 : f32
    %10 = vector.broadcast %cst_4 : f32 to vector<16x128xf32>
    %11 = arith.mulf %9, %10 : vector<16x128xf32>
    %cst_5 = arith.constant -1.45315206 : f32
    %12 = vector.broadcast %cst_5 : f32 to vector<16x128xf32>
    %13 = arith.addf %12, %11 : vector<16x128xf32>
    %14 = arith.mulf %9, %13 : vector<16x128xf32>
    %cst_6 = arith.constant 1.42141378 : f32
    %15 = vector.broadcast %cst_6 : f32 to vector<16x128xf32>
    %16 = arith.addf %15, %14 : vector<16x128xf32>
    %17 = arith.mulf %9, %16 : vector<16x128xf32>
    %cst_7 = arith.constant -0.284496725 : f32
    %18 = vector.broadcast %cst_7 : f32 to vector<16x128xf32>
    %19 = arith.addf %18, %17 : vector<16x128xf32>
    %20 = arith.mulf %9, %19 : vector<16x128xf32>
    %cst_8 = arith.constant 0.254829586 : f32
    %21 = vector.broadcast %cst_8 : f32 to vector<16x128xf32>
    %22 = arith.addf %21, %20 : vector<16x128xf32>
    %23 = arith.mulf %9, %22 : vector<16x128xf32>
    %cst_9 = arith.constant 0.000000e+00 : f32
    %24 = vector.broadcast %cst_9 : f32 to vector<16x128xf32>
    %25 = arith.subf %24, %3 : vector<16x128xf32>
    %26 = arith.mulf %25, %3 : vector<16x128xf32>
    %27 = math.exp %26 : vector<16x128xf32>
    %28 = arith.mulf %23, %27 : vector<16x128xf32>
    %cst_10 = arith.constant 1.000000e+00 : f32
    %29 = vector.broadcast %cst_10 : f32 to vector<16x128xf32>
    %30 = arith.subf %29, %28 : vector<16x128xf32>
    %cst_11 = arith.constant 0.000000e+00 : f32
    %31 = vector.broadcast %cst_11 : f32 to vector<16x128xf32>
    %32 = arith.cmpf olt, %0, %31 : vector<16x128xf32>
    %cst_12 = arith.constant 0.000000e+00 : f32
    %33 = vector.broadcast %cst_12 : f32 to vector<16x128xf32>
    %34 = arith.subf %33, %30 : vector<16x128xf32>
    %35 = arith.select %32, %34, %30 : vector<16x128xi1>, vector<16x128xf32>
    %c0_13 = arith.constant 0 : index
    %c0_14 = arith.constant 0 : index
    %36 = vector.load %arg2[%c0_13, %c0_14] : memref<16x128xf32, #tpu.memory_space<vmem>>, vector<16x128xf32>
    tpu.vector_store %arg2[%c0_13, %c0_14], %35 {strides = array<i32>} : memref<16x128xf32, #tpu.memory_space<vmem>>, vector<16x128xf32>,
    return
  }
  func.func @transform_0(%arg0: i32) -> (i32, i32) {
    %c0_i32 = arith.constant 0 : i32
    %c0_i32_0 = arith.constant 0 : i32
    return %arg0, %c0_i32 : i32, i32
  }
  func.func @transform_1(%arg0: i32) -> (i32, i32) {
    %c0_i32 = arith.constant 0 : i32
    %c0_i32_0 = arith.constant 0 : i32
    return %arg0, %c0_i32 : i32, i32
  }
}

</mosaic_0001>

<llo_original>
// kernel: tpu_custom_call.1
$region0: #{tpu_custom_call.1}
  #allocation0 [shape = 'u32[]', space=smem, size = 0x4, offset = 0x4, fixed_abs, tag = 'smem constant byte address 0x4 - core index']
  #allocation1 [shape = 'u32[72,128]{1,0:T(1,128)}', space=vmem, size = 0x9000, scoped, tag = 'internal scratch']
  %s0 = inlined_call_operand.hbm [shape: f32[16,128], index: 0, kind: input, shape index: {}]
  %s1 = inlined_call_operand.hbm [shape: f32[16,128], index: 1, kind: output, shape index: {}]
  %s2 = sld [smem:[#allocation0]]
  $region18: #{tpu_custom_call.1} parent=0
    _
  %s4 = ssub.s32 1, %s2
  %s5 = scalar_select 0, %s4, %s2
  $region1: #{tpu_custom_call.1} parent=0
    #allocation2 [shape = 'u8[8192]{0}', space=vmem, size = 0x2000, scoped, tag = 'input window, operand 0, single buffered']
    #allocation3 [shape = 's32[1]{0}', space=sflag, size = 0x4, scoped, tag = 'scoped memory for tpu_custom_call.1']
    #allocation4 [shape = 's32[1]{0}', space=sflag, size = 0x4, scoped, tag = 'scoped memory for tpu_custom_call.1']
    #allocation5 [shape = 'u8[8192]{0}', space=vmem, size = 0x2000, scoped, tag = 'output window, operand 0, single buffered']
    %6 = vsyncpa [#allocation3], 0
    %7 = vsyncpa [#allocation4], 0
    // Predicated region
    $region2: #{tpu_custom_call.1} parent=1 // pred_check
      _
    $region3: #{tpu_custom_call.1} parent=1 // pred_check_branch
      %9 = sbr.rel (0) target = $region5
    $region4: #{tpu_custom_call.1} parent=1 // pred_region
      %11 = vsyncadd [#allocation3], 0
      %s12 = sshll.u32 %s0, 4
      %s13 = int_to_ptr.hbm [resolvable:$true] %s12
      %s14 = sshll.u32 [#allocation2], 4
      %s15 = int_to_ptr.vmem [resolvable:$true] %s14
      %20 = dma.hbm_to_vmem [thread:$0]  %s13, 256, %s15, [#allocation3], 128, 128, 8
    $region5: #{tpu_custom_call.1} parent=1 // pred_fallthru
      _
    // Predicated region
    $region6: #{tpu_custom_call.1} parent=1 // pred_check
      _
    $region7: #{tpu_custom_call.1} parent=1 // pred_check_branch
      %22 = sbr.rel (0) target = $region9
    $region8: #{tpu_custom_call.1} parent=1 // pred_region
      %24 = dma.done [#allocation3], 256
    $region9: #{tpu_custom_call.1} parent=1 // pred_fallthru
      _
    %v25 = vld [vmem:[#allocation2] sm:$0xff]
    %v26 = vld [vmem:[#allocation2 + $0x8] sm:$0xff]
    %v27 = vand.u32 2147483647, %v25
    %v28 = vand.u32 2147483647, %v26
    %v29 = vmin.f32 %v27, 8.0
    %v30 = vmin.f32 %v28, 8.0
    %v31 = vmul.f32 %v29, 0.3275911
    %v32 = vmul.f32 %v30, 0.3275911
    %v33 = vadd.f32 %v31, 1.0
    %v34 = vadd.f32 %v32, 1.0
    %v35 = vrcp.pop %v33
    %v36 = vmul.f32 %v33, %v35
    %v37 = vsub.f32 1.0, %v36
    %v38 = vmul.f32 %v35, %v37
    %v39 = vadd.f32 %v35, %v38
    %vm40 = vweird.f32 %v33
    %vm41 = vweird.f32 %v35
    %vm42 = vmor %vm40, %vm41
    %v43 = vsel %vm42, %v35, %v39
    %v44 = vand.u32 2147483647, %v33
    %vm45 = vcmp.eq.f32.partialorder %v44, 8.507059e+37
    %v46 = vand.u32 %v33, 2147483648
    %v47 = vor.u32 1.1754944e-38, %v46
    %v48 = vsel %vm45, %v47, %v43
    %v49 = vmul.f32 1.0, %v48
    %v50 = vrcp.pop %v34
    %v51 = vmul.f32 %v34, %v50
    %v52 = vsub.f32 1.0, %v51
    %v53 = vmul.f32 %v50, %v52
    %v54 = vadd.f32 %v50, %v53
    %vm55 = vweird.f32 %v34
    %vm56 = vweird.f32 %v50
    %vm57 = vmor %vm55, %vm56
    %v58 = vsel %vm57, %v50, %v54
    %v59 = vand.u32 2147483647, %v34
    %vm60 = vcmp.eq.f32.partialorder %v59, 8.507059e+37
    %v61 = vand.u32 %v34, 2147483648
    %v62 = vor.u32 1.1754944e-38, %v61
    %v63 = vsel %vm60, %v62, %v58
    %v64 = vmul.f32 1.0, %v63
    %v65 = vmul.f32 %v49, 1.0614054
    %v66 = vmul.f32 %v64, 1.0614054
    %v67 = vadd.f32 %v65, -1.4531521
    %v68 = vadd.f32 %v66, -1.4531521
    %v69 = vmul.f32 %v49, %v67
    %v70 = vmul.f32 %v64, %v68
    %v71 = vadd.f32 %v69, 1.4214138
    %v72 = vadd.f32 %v70, 1.4214138
    %v73 = vmul.f32 %v49, %v71
    %v74 = vmul.f32 %v64, %v72
    %v75 = vadd.f32 %v73, -0.28449672
    %v76 = vadd.f32 %v74, -0.28449672
    %v77 = vmul.f32 %v49, %v75
    %v78 = vmul.f32 %v64, %v76
    %v79 = vadd.f32 %v77, 0.2548296
    %v80 = vadd.f32 %v78, 0.2548296
    %v81 = vmul.f32 %v49, %v79
    %v82 = vmul.f32 %v64, %v80
    %v83 = vsub.f32 0.0, %v29
    %v84 = vsub.f32 0.0, %v30
    %v85 = vmul.f32 %v83, %v29
    %v86 = vmul.f32 %v84, %v30
    %v87 = vmul.f32 %v85, 1.442695
    %v88 = vpow.pop %v87
    %v89 = vmul.f32 %v86, 1.442695
    %v90 = vpow.pop %v89
    %v91 = vmul.f32 %v81, %v88
    %v92 = vmul.f32 %v82, %v90
    %v93 = vsub.f32 1.0, %v91
    %v94 = vsub.f32 1.0, %v92
    %vm95 = vcmp.lt.f32.partialorder %v25, 0.0
    %vm96 = vcmp.lt.f32.partialorder %v26, 0.0
    %v97 = vsub.f32 0.0, %v93
    %v98 = vsub.f32 0.0, %v94
    %v99 = vsel %vm95, %v97, %v93
    %v100 = vsel %vm96, %v98, %v94
    %101 = vst [vmem:[#allocation5] sm:$0xff] %v99
    %102 = vst [vmem:[#allocation5 + $0x8] sm:$0xff] %v100
    // Predicated region
    $region10: #{tpu_custom_call.1} parent=1 // pred_check
      _
    $region11: #{tpu_custom_call.1} parent=1 // pred_check_branch
      %104 = sbr.rel (0) target = $region13
    $region12: #{tpu_custom_call.1} parent=1 // pred_region
      %106 = vsyncadd [#allocation4], 0
      %s107 = sshll.u32 [#allocation5], 4
      %s108 = int_to_ptr.vmem [resolvable:$true] %s107
      %s109 = sshll.u32 %s1, 4
      %s110 = int_to_ptr.hbm [resolvable:$true] %s109
      %115 = dma.vmem_to_hbm [thread:$0]  %s108, 256, %s110, [#allocation4], 128, 128, 8
    $region13: #{tpu_custom_call.1} parent=1 // pred_fallthru
      _
    // Predicated region
    $region14: #{tpu_custom_call.1} parent=1 // pred_check
      _
    $region15: #{tpu_custom_call.1} parent=1 // pred_check_branch
      %117 = sbr.rel (0) target = $region17
    $region16: #{tpu_custom_call.1} parent=1 // pred_region
      %119 = dma.done [#allocation4], 256
    $region17: #{tpu_custom_call.1} parent=1 // pred_fallthru
      _
    %120 = vsyncpa [#allocation3], 1
    %121 = vsyncpa [#allocation4], 1

</llo_original>
